<compile_context>
chip_gen: v6e
topology: v6e:2x2x1
jax: 0.10.0
libtpu: 0.0.40
codegen_flags: <defaults>
</compile_context>

<pallas_src>
from functools import partial

import numpy as np
import jax
import jax.numpy as jnp
from jax.experimental import pallas as pl
from jax.experimental.pallas import tpu as pltpu


# --------------------------- block-size selection --------------------------- #
def _pick_block(n_spec, n_nodes, f_in, f_out, budget_bytes=20 * 1024 * 1024):
    """Largest spectral block size that divides n_spec and keeps the
    double-buffered VMEM working set under `budget_bytes`."""
    def working_set(tk):
        u_blk = tk * n_nodes * 2               # bf16 U^T block
        th_blk = tk * f_in * f_out * 4         # f32 Theta block
        x_res = n_nodes * f_in * 2             # bf16 x (resident)
        y_blk = f_out * n_nodes * 4            # f32 y^T output block
        acc = f_out * n_nodes * 4              # f32 accumulator scratch
        return 2 * (u_blk + th_blk + x_res + y_blk) + acc

    for tk in (2048, 1024, 512, 256, 128, 64, 32, 16, 8):
        if n_spec % tk == 0 and working_set(tk) <= budget_bytes:
            return tk
    return n_spec   # tiny / odd n_spec: single block


# ------------------------------ Pallas kernel ------------------------------- #
def fused_spectral_kernel(u_t_ref, x_ref, theta_ref, y_t_ref, acc_ref,
                          *, f_in, f_out):
    """Fused  x_hat = U^T x  ->  per-node Theta filter  ->  y = U y_hat,
    reusing each U^T block for both matmuls.  Grid = (split, spectral_block);
    y is accumulated transposed (F_out, N) in a resident f32 scratch."""
    k = pl.program_id(1)

    @pl.when(k == 0)
    def _init():
        acc_ref[...] = jnp.zeros_like(acc_ref)

    u_t = u_t_ref[...]                                     # (tk, N) bf16
    # x_hat rows for this spectral block: U^T_blk @ x -> (tk, F_in), f32 acc.
    x_hat = jnp.dot(u_t, x_ref[...], preferred_element_type=jnp.float32)

    # Per-node spectral filter: y_hat[n, o] = sum_i x_hat[n, i] * Theta[n, i, o].
    # Theta is lane-dense (tk, F_in*F_out); unrolled VPU MAC over small F_in.
    theta = theta_ref[...]                                 # (tk, F_in*F_out) f32
    y_hat = x_hat[:, 0:1] * theta[:, 0:f_out]
    for i in range(1, f_in):
        y_hat = y_hat + x_hat[:, i:i + 1] * theta[:, i * f_out:(i + 1) * f_out]

    # Second matmul reuses the already-resident U^T block (no second HBM read):
    #   y^T += y_hat_blk^T @ U^T_blk   -> (F_out, N)
    y_hat_t = y_hat.T.astype(jnp.bfloat16)                 # small (tk,F_out) xpose
    acc_ref[...] += jnp.dot(y_hat_t, u_t, preferred_element_type=jnp.float32)

    @pl.when(k == pl.num_programs(1) - 1)
    def _finalize():
        y_t_ref[...] = acc_ref[...].astype(y_t_ref.dtype)


# ------------------------------ wrapper ------------------------------------- #
def spectral_gnn_forward(U_T, x, Theta2D, f_out):
    """U_T: (N_spec, N) bf16 host-precomputed U.T (spectral axis possibly
    zero-padded), x: (N, F_in), Theta2D: (N_spec, F_in*F_out) f32.
    Returns y: (N, F_out) f32."""
    n_spec, n_nodes = U_T.shape
    n_x, f_in = x.shape
    assert n_x == n_nodes
    assert Theta2D.shape == (n_spec, f_in * f_out)

    tk = _pick_block(n_spec, n_nodes, f_in, f_out)
    kt = n_spec // tk
    # Give v7x's two TensorCores a parallel axis when there are >= 2 blocks.
    num_splits = 2 if (kt >= 2 and kt % 2 == 0) else 1
    k_per = kt // num_splits

    x_bf = x.astype(jnp.bfloat16)   # tiny dtype plumbing for uniform bf16 dots

    y_t_partial = pl.pallas_call(
        partial(fused_spectral_kernel, f_in=f_in, f_out=f_out),
        out_shape=jax.ShapeDtypeStruct((num_splits, f_out, n_nodes), jnp.float32),
        grid_spec=pltpu.PrefetchScalarGridSpec(
            num_scalar_prefetch=0,
            grid=(num_splits, k_per),
            in_specs=[
                # U^T row block: streamed once, reused by both matmuls.
                pl.BlockSpec((tk, n_nodes), lambda c, k: (c * k_per + k, 0)),
                # x: fully VMEM-resident (constant block index).
                pl.BlockSpec((n_nodes, f_in), lambda c, k: (0, 0)),
                # Theta (lane-dense 2-D) block for the same spectral rows.
                pl.BlockSpec((tk, f_in * f_out), lambda c, k: (c * k_per + k, 0)),
            ],
            # Lane-dense (F_out, N) partial-y^T output, one slab per split.
            out_specs=pl.BlockSpec((None, f_out, n_nodes), lambda c, k: (c, 0, 0)),
            scratch_shapes=[pltpu.VMEM((f_out, n_nodes), jnp.float32)],
        ),
        compiler_params=pltpu.CompilerParams(
            dimension_semantics=("parallel", "arbitrary"),
            # Raises v5e's 16 MiB default, matches v6e/v7x default, and leaves
            # >= 32 MiB headroom under v7x's 64 MiB physical VMEM.
            vmem_limit_bytes=32 * 1024 * 1024,
        ),
        cost_estimate=pl.CostEstimate(
            flops=(2 * n_spec * n_nodes * f_in
                   + 2 * n_spec * f_in * f_out
                   + 2 * n_spec * n_nodes * f_out),
            transcendentals=0,
            bytes_accessed=(2 * n_spec * n_nodes            # bf16 U^T, read once
                            + 2 * n_nodes * f_in            # bf16 x
                            + 4 * n_spec * f_in * f_out     # f32 Theta
                            + 4 * num_splits * f_out * n_nodes),
        ),
    )(U_T, x_bf, Theta2D)

    # Wrapper-side layout plumbing: sum per-core partials, transpose back.
    return jnp.sum(y_t_partial, axis=0).T


# ----------------------- Host-side setup (== __init__) ---------------------- #
def compute_normalized_laplacian(adj):
    # L = I - D^{-1/2} A D^{-1/2}
    N = adj.shape[0]
    degrees = adj.sum(axis=1)
    d_inv_sqrt = np.power(degrees + 1e-10, -0.5)
    d_inv_sqrt[np.isinf(d_inv_sqrt)] = 0.0
    D_inv_sqrt = np.diag(d_inv_sqrt)
    return np.eye(N, dtype=np.float64) - D_inv_sqrt @ adj @ D_inv_sqrt


def compute_spectral_decomposition(L):
    # TODO(synk): eigendecomposition has no Pallas equivalent; it is
    # __init__-time host-side setup in the PyTorch module as well.
    lambdas, U = np.linalg.eigh(L)   # L symmetric for an undirected graph
    return lambdas.astype(np.float32), U.astype(np.float32)


def build_params(key, N, in_features, out_features):
    k_adj, k_theta = jax.random.split(key)
    a = np.asarray(jax.random.uniform(k_adj, (N, N)) < 0.05, dtype=np.float64)
    adj = np.triu(a, 1)
    adj = adj + adj.T  # symmetric, no self loops

    L = compute_normalized_laplacian(adj)
    _, U = compute_spectral_decomposition(L)

    Theta = jax.random.normal(k_theta, (N, in_features, out_features), jnp.float32)

    # Device buffers for the fused kernel: only U^T is kept (bf16), Theta is
    # flattened lane-dense.  Pad the spectral axis to a multiple of 128 so
    # large blocks always divide it; padded rows are zero eigenvectors and
    # contribute nothing to y.
    U_T = np.ascontiguousarray(U.T)
    Theta2D = np.asarray(Theta).reshape(N, in_features * out_features)
    n_spec = ((N + 127) // 128) * 128
    if n_spec != N:
        U_T = np.pad(U_T, ((0, n_spec - N), (0, 0)))
        Theta2D = np.pad(Theta2D, ((0, n_spec - N), (0, 0)))

    return (jnp.asarray(U, jnp.float32),            # f32, reference only
            jnp.asarray(U_T, jnp.bfloat16),         # kernel buffer
            Theta,                                  # f32, reference only
            jnp.asarray(Theta2D, jnp.float32))      # kernel buffer


# ---------------------------------- main ------------------------------------ #
if __name__ == "__main__":
    N, F_in, F_out = 128, 8, 16

    key = jax.random.PRNGKey(0)
    k_params, k_x = jax.random.split(key)

    U, U_T_bf16, Theta, Theta2D = build_params(k_params, N, F_in, F_out)
    x = jax.random.normal(k_x, (N, F_in), jnp.float32)

    y = spectral_gnn_forward(U_T_bf16, x, Theta2D, F_out)
    y = jax.block_until_ready(y)

    # Pure-JAX f32 reference of the same forward semantics.
    x_hat_ref = U.T @ x
    y_hat_ref = jnp.einsum("ni,nio->no", x_hat_ref, Theta)
    y_ref = U @ y_hat_ref

    # U / x are streamed in bf16 (memory-bound optimization); accumulation is
    # f32, so the observed error is ~1e-2 relative -> relaxed tolerances.
    np.testing.assert_allclose(np.asarray(y), np.asarray(y_ref),
                               rtol=5e-2, atol=1e-1)

    print("KERNEL_OK")
</pallas_src>

<mosaic_0001>
module attributes {stable_mosaic.version = 11 : i64} {
  func.func @fused_spectral_kernel(%arg0: i32, %arg1: i32, %arg2: memref<128x128xbf16, #tpu.memory_space<vmem>>, %arg3: memref<128x8xbf16, #tpu.memory_space<vmem>>, %arg4: memref<128x128xf32, #tpu.memory_space<vmem>>, %arg5: memref<1x16x128xf32, #tpu.memory_space<vmem>>, %arg6: memref<16x128xf32, #tpu.memory_space<vmem>>) attributes {dimension_semantics = [#tpu.dimension_semantics<parallel>, #tpu.dimension_semantics<arbitrary>], iteration_bounds = array<i64: 1, 1>, scalar_prefetch = 0 : i64, scratch_operands = 1 : i64, tpu.core_type = #tpu.core_type<tc>, window_params = [{transform_indices = @transform_0, window_bounds = array<i64: 128, 128>}, {pipeline_mode = #tpu.pipeline_mode<synchronous>, transform_indices = @transform_1, window_bounds = array<i64: 128, 8>}, {transform_indices = @transform_2, window_bounds = array<i64: 128, 128>}, {transform_indices = @transform_3, window_bounds = array<i64: 1, 16, 128>}]} {
    %c0_i32 = arith.constant 0 : i32
    %0 = arith.cmpi eq, %arg1, %c0_i32 : i32
    %1 = arith.extui %0 : i1 to i32
    %c0_i32_0 = arith.constant 0 : i32
    %2 = arith.cmpi ne, %1, %c0_i32_0 : i32
    scf.if %2 {
      %cst_13 = arith.constant 0.000000e+00 : f32
      %55 = vector.broadcast %cst_13 : f32 to vector<16x128xf32>
      %c0_14 = arith.constant 0 : index
      %c0_15 = arith.constant 0 : index
      %56 = vector.load %arg6[%c0_14, %c0_15] : memref<16x128xf32, #tpu.memory_space<vmem>>, vector<16x128xf32>
      tpu.vector_store %arg6[%c0_14, %c0_15], %55 {strides = array<i32>} : memref<16x128xf32, #tpu.memory_space<vmem>>, vector<16x128xf32>,
    } else {
    }
    %c0 = arith.constant 0 : index
    %c0_1 = arith.constant 0 : index
    %3 = vector.load %arg2[%c0, %c0_1] : memref<128x128xbf16, #tpu.memory_space<vmem>>, vector<128x128xbf16>
    %c0_2 = arith.constant 0 : index
    %c0_3 = arith.constant 0 : index
    %4 = vector.load %arg3[%c0_2, %c0_3] : memref<128x8xbf16, #tpu.memory_space<vmem>>, vector<128x8xbf16>
    %cst = arith.constant dense<0.000000e+00> : vector<128x8xf32>
    %5 = tpu.matmul %3, %4, %cst {dimension_numbers = #tpu.dot_dimension_numbers<[1], [0], [0], [1], [0, 0, 1, 1], [], []>} : vector<128x128xbf16>, vector<128x8xbf16>, vector<128x8xf32> -> vector<128x8xf32>
    %c0_4 = arith.constant 0 : index
    %c0_5 = arith.constant 0 : index
    %6 = vector.load %arg4[%c0_4, %c0_5] : memref<128x128xf32, #tpu.memory_space<vmem>>, vector<128x128xf32>
    %7 = vector.extract_strided_slice %5 {offsets = [0, 0], sizes = [128, 1], strides = [1, 1]} : vector<128x8xf32> to vector<128x1xf32>
    %8 = vector.extract_strided_slice %6 {offsets = [0, 0], sizes = [128, 16], strides = [1, 1]} : vector<128x128xf32> to vector<128x16xf32>
    %9 = vector.broadcast %7 : vector<128x1xf32> to vector<128x16xf32>
    %10 = arith.mulf %9, %8 : vector<128x16xf32>
    %11 = vector.extract_strided_slice %5 {offsets = [0, 1], sizes = [128, 1], strides = [1, 1]} : vector<128x8xf32> to vector<128x1xf32>
    %12 = vector.extract_strided_slice %6 {offsets = [0, 16], sizes = [128, 16], strides = [1, 1]} : vector<128x128xf32> to vector<128x16xf32>
    %13 = vector.broadcast %11 : vector<128x1xf32> to vector<128x16xf32>
    %14 = arith.mulf %13, %12 : vector<128x16xf32>
    %15 = arith.addf %10, %14 : vector<128x16xf32>
    %16 = vector.extract_strided_slice %5 {offsets = [0, 2], sizes = [128, 1], strides = [1, 1]} : vector<128x8xf32> to vector<128x1xf32>
    %17 = vector.extract_strided_slice %6 {offsets = [0, 32], sizes = [128, 16], strides = [1, 1]} : vector<128x128xf32> to vector<128x16xf32>
    %18 = vector.broadcast %16 : vector<128x1xf32> to vector<128x16xf32>
    %19 = arith.mulf %18, %17 : vector<128x16xf32>
    %20 = arith.addf %15, %19 : vector<128x16xf32>
    %21 = vector.extract_strided_slice %5 {offsets = [0, 3], sizes = [128, 1], strides = [1, 1]} : vector<128x8xf32> to vector<128x1xf32>
    %22 = vector.extract_strided_slice %6 {offsets = [0, 48], sizes = [128, 16], strides = [1, 1]} : vector<128x128xf32> to vector<128x16xf32>
    %23 = vector.broadcast %21 : vector<128x1xf32> to vector<128x16xf32>
    %24 = arith.mulf %23, %22 : vector<128x16xf32>
    %25 = arith.addf %20, %24 : vector<128x16xf32>
    %26 = vector.extract_strided_slice %5 {offsets = [0, 4], sizes = [128, 1], strides = [1, 1]} : vector<128x8xf32> to vector<128x1xf32>
    %27 = vector.extract_strided_slice %6 {offsets = [0, 64], sizes = [128, 16], strides = [1, 1]} : vector<128x128xf32> to vector<128x16xf32>
    %28 = vector.broadcast %26 : vector<128x1xf32> to vector<128x16xf32>
    %29 = arith.mulf %28, %27 : vector<128x16xf32>
    %30 = arith.addf %25, %29 : vector<128x16xf32>
    %31 = vector.extract_strided_slice %5 {offsets = [0, 5], sizes = [128, 1], strides = [1, 1]} : vector<128x8xf32> to vector<128x1xf32>
    %32 = vector.extract_strided_slice %6 {offsets = [0, 80], sizes = [128, 16], strides = [1, 1]} : vector<128x128xf32> to vector<128x16xf32>
    %33 = vector.broadcast %31 : vector<128x1xf32> to vector<128x16xf32>
    %34 = arith.mulf %33, %32 : vector<128x16xf32>
    %35 = arith.addf %30, %34 : vector<128x16xf32>
    %36 = vector.extract_strided_slice %5 {offsets = [0, 6], sizes = [128, 1], strides = [1, 1]} : vector<128x8xf32> to vector<128x1xf32>
    %37 = vector.extract_strided_slice %6 {offsets = [0, 96], sizes = [128, 16], strides = [1, 1]} : vector<128x128xf32> to vector<128x16xf32>
    %38 = vector.broadcast %36 : vector<128x1xf32> to vector<128x16xf32>
    %39 = arith.mulf %38, %37 : vector<128x16xf32>
    %40 = arith.addf %35, %39 : vector<128x16xf32>
    %41 = vector.extract_strided_slice %5 {offsets = [0, 7], sizes = [128, 1], strides = [1, 1]} : vector<128x8xf32> to vector<128x1xf32>
    %42 = vector.extract_strided_slice %6 {offsets = [0, 112], sizes = [128, 16], strides = [1, 1]} : vector<128x128xf32> to vector<128x16xf32>
    %43 = vector.broadcast %41 : vector<128x1xf32> to vector<128x16xf32>
    %44 = arith.mulf %43, %42 : vector<128x16xf32>
    %45 = arith.addf %40, %44 : vector<128x16xf32>
    %46 = tpu.transpose %45, [1, 0] : vector<128x16xf32> -> vector<16x128xf32>
    %47 = arith.truncf %46 : vector<16x128xf32> to vector<16x128xbf16>
    %c0_6 = arith.constant 0 : index
    %c0_7 = arith.constant 0 : index
    %48 = vector.load %arg6[%c0_6, %c0_7] : memref<16x128xf32, #tpu.memory_space<vmem>>, vector<16x128xf32>
    %cst_8 = arith.constant dense<0.000000e+00> : vector<16x128xf32>
    %49 = tpu.matmul %47, %3, %cst_8 {dimension_numbers = #tpu.dot_dimension_numbers<[1], [0], [0], [1], [0, 0, 1, 1], [], []>} : vector<16x128xbf16>, vector<128x128xbf16>, vector<16x128xf32> -> vector<16x128xf32>
    %50 = arith.addf %48, %49 : vector<16x128xf32>
    %c0_9 = arith.constant 0 : index
    %c0_10 = arith.constant 0 : index
    %51 = vector.load %arg6[%c0_9, %c0_10] : memref<16x128xf32, #tpu.memory_space<vmem>>, vector<16x128xf32>
    tpu.vector_store %arg6[%c0_9, %c0_10], %50 {strides = array<i32>} : memref<16x128xf32, #tpu.memory_space<vmem>>, vector<16x128xf32>,
    %c0_i32_11 = arith.constant 0 : i32
    %52 = arith.cmpi eq, %arg1, %c0_i32_11 : i32
    %53 = arith.extui %52 : i1 to i32
    %c0_i32_12 = arith.constant 0 : i32
    %54 = arith.cmpi ne, %53, %c0_i32_12 : i32
    scf.if %54 {
      %c0_13 = arith.constant 0 : index
      %c0_14 = arith.constant 0 : index
      %55 = vector.load %arg6[%c0_13, %c0_14] : memref<16x128xf32, #tpu.memory_space<vmem>>, vector<16x128xf32>
      %c0_15 = arith.constant 0 : index
      %c0_16 = arith.constant 0 : index
      %c0_17 = arith.constant 0 : index
      %56 = vector.load %arg5[%c0_15, %c0_16, %c0_17] : memref<1x16x128xf32, #tpu.memory_space<vmem>>, vector<1x16x128xf32>
      %57 = vector.shape_cast %56 : vector<1x16x128xf32> to vector<16x128xf32>
      %58 = vector.shape_cast %55 : vector<16x128xf32> to vector<1x16x128xf32>
      tpu.vector_store %arg5[%c0_15, %c0_16, %c0_17], %58 {strides = array<i32>} : memref<1x16x128xf32, #tpu.memory_space<vmem>>, vector<1x16x128xf32>,
    } else {
    }
    return
  }
  func.func @transform_0(%arg0: i32, %arg1: i32) -> (i32, i32) {
    %c1_i32 = arith.constant 1 : i32
    %0 = arith.muli %arg0, %c1_i32 : i32
    %1 = arith.addi %0, %arg1 : i32
    %c0_i32 = arith.constant 0 : i32
    %c0_i32_0 = arith.constant 0 : i32
    return %1, %c0_i32 : i32, i32
  }
  func.func @transform_1(%arg0: i32, %arg1: i32) -> (i32, i32) {
    %c0_i32 = arith.constant 0 : i32
    %c0_i32_0 = arith.constant 0 : i32
    %c0_i32_1 = arith.constant 0 : i32
    return %c0_i32, %c0_i32_0 : i32, i32
  }
  func.func @transform_2(%arg0: i32, %arg1: i32) -> (i32, i32) {
    %c1_i32 = arith.constant 1 : i32
    %0 = arith.muli %arg0, %c1_i32 : i32
    %1 = arith.addi %0, %arg1 : i32
    %c0_i32 = arith.constant 0 : i32
    %c0_i32_0 = arith.constant 0 : i32
    return %1, %c0_i32 : i32, i32
  }
  func.func @transform_3(%arg0: i32, %arg1: i32) -> (i32, i32, i32) {
    %c0_i32 = arith.constant 0 : i32
    %c0_i32_0 = arith.constant 0 : i32
    %c0_i32_1 = arith.constant 0 : i32
    return %arg0, %c0_i32, %c0_i32_0 : i32, i32, i32
  }
}

</mosaic_0001>

<llo_original>
// kernel: tpu_custom_call.1
$region0: #{tpu_custom_call.1}
  #allocation0 [shape = 'u32[]', space=smem, size = 0x4, offset = 0x4, fixed_abs, tag = 'smem constant byte address 0x4 - core index']
  #allocation1 [shape = 'u32[144,128]{1,0:T(1,128)}', space=vmem, size = 0x12000, scoped, tag = 'internal scratch']
  #allocation2 [shape = 'f32[16,128]{1,0:T(8,128)}', space=vmem, size = 0x2000, scoped, tag = 'scratch operand']
  %s0 = inlined_call_operand.vmem [shape: bf16[128,128], index: 0, kind: input, shape index: {}]
  %s1 = inlined_call_operand.vmem [shape: bf16[128,8], index: 1, kind: input, shape index: {}]
  %s2 = inlined_call_operand.hbm [shape: f32[128,128], index: 2, kind: input, shape index: {}]
  %s3 = inlined_call_operand.hbm [shape: f32[1,16,128], index: 3, kind: output, shape index: {}]
  %s4 = sld [smem:[#allocation0]]
  $region34: #{tpu_custom_call.1} parent=0
    _
  %s6 = ssub.s32 1, %s4
  %s7 = scalar_select 0, %s6, %s4
  $region1: #{tpu_custom_call.1} parent=0
    #allocation3 [shape = 'u8[65536]{0}', space=vmem, size = 0x10000, scoped, tag = 'input window, operand 2, single buffered']
    #allocation4 [shape = 's32[1]{0}', space=sflag, size = 0x4, scoped, tag = 'scoped memory for tpu_custom_call.1']
    #allocation5 [shape = 's32[1]{0}', space=sflag, size = 0x4, scoped, tag = 'scoped memory for tpu_custom_call.1']
    #allocation6 [shape = 'u8[8192]{0}', space=vmem, size = 0x2000, scoped, tag = 'output window, operand 0, single buffered']
    %8 = vsyncpa [#allocation4], 0
    %9 = vsyncpa [#allocation5], 0
    // Predicated region
    $region2: #{tpu_custom_call.1} parent=1 // pred_check
      _
    $region3: #{tpu_custom_call.1} parent=1 // pred_check_branch
      %11 = sbr.rel (0) target = $region5
    $region4: #{tpu_custom_call.1} parent=1 // pred_region
      %s12 = sadd.s32 0, 0
      %s13 = smul.u32 16, %s12
      %p14 = scmp.lt.s32.totalorder %s13, 15
      %s15 = scalar_select %p14, %s13, 15
      %s16 = smul.addr %s15, 4
      %s17 = scalar_lea.vmem %s0, %s16
      %s18 = sadd.s32 0, 0
      %s19 = smul.u32 16, %s18
    $region5: #{tpu_custom_call.1} parent=1 // pred_fallthru
      _
    // Predicated region
    $region6: #{tpu_custom_call.1} parent=1 // pred_check
      _
    $region7: #{tpu_custom_call.1} parent=1 // pred_check_branch
      %21 = sbr.rel (0) target = $region9
    $region8: #{tpu_custom_call.1} parent=1 // pred_region
      _
    $region9: #{tpu_custom_call.1} parent=1 // pred_fallthru
      _
    // Predicated region
    $region10: #{tpu_custom_call.1} parent=1 // pred_check
      _
    $region11: #{tpu_custom_call.1} parent=1 // pred_check_branch
      %23 = sbr.rel (0) target = $region13
    $region12: #{tpu_custom_call.1} parent=1 // pred_region
      %s24 = sadd.s32 0, 0
      %s25 = smul.u32 16, %s24
      %s27 = ssub.s32 2048, 2048
      %28 = vsyncadd [#allocation4], %s27
      %s29 = smul.addr %s25, 128
      %s30 = scalar_lea.hbm %s2, %s29
      %s31 = sshll.u32 [#allocation3], 4
      %s32 = int_to_ptr.vmem [resolvable:$true] %s31
      %37 = dma.hbm_to_vmem [thread:$0]  %s30, 2048, %s32, [#allocation4], 128, 128, 8
    $region13: #{tpu_custom_call.1} parent=1 // pred_fallthru
      _
    // Predicated region
    $region14: #{tpu_custom_call.1} parent=1 // pred_check
      _
    $region15: #{tpu_custom_call.1} parent=1 // pred_check_branch
      %39 = sbr.rel (0) target = $region17
    $region16: #{tpu_custom_call.1} parent=1 // pred_region
      %40 = dma.done [#allocation4], 2048
    $region17: #{tpu_custom_call.1} parent=1 // pred_fallthru
      _
    %s41 = sadd.s32 0, 0
    %s42 = smul.u32 16, %s41
    %p43 = scmp.lt.s32.totalorder %s42, 15
    %s44 = scalar_select %p43, %s42, 15
    %s45 = smul.addr %s44, 4
    %s46 = scalar_lea.vmem %s0, %s45
    %s47 = sadd.s32 0, 0
    %s48 = smul.u32 16, %s47
    %p49 = scmp.lt.s32.totalorder %s48, 15
    %s50 = scalar_select %p49, %s48, 15
    %s51 = smul.addr %s50, 4
    %s52 = scalar_lea.vmem %s0, %s51
    %s53 = sadd.s32 0, 0
    %s54 = smul.u32 16, %s53
    %s55 = sadd.s32 0, 0
    %s56 = smul.u32 16, %s55
    %p58 = scmp.eq.s32.totalorder 0, 0
    // Predicated region
    $region18: #{tpu_custom_call.1} parent=1 // pred_check
      %p59 = pneg %p58
    $region19: #{tpu_custom_call.1} parent=1 // pred_check_branch
      %61 = sbr.rel (%p59) target = $region21
    $region20: #{tpu_custom_call.1} parent=1 // pred_region
      %62 = vst [vmem:[#allocation2] sm:$0xff] 0.0
      %63 = vst [vmem:[#allocation2 + $0x8] sm:$0xff] 0.0
    $region21: #{tpu_custom_call.1} parent=1 // pred_fallthru
      _
    %v64 = vld [vmem:[%s52] sm:$0xf]
    %v65 = vld [vmem:[%s52 + $0x4] sm:$0xf]
    %v66 = vld [vmem:[%s52 + $0x8] sm:$0xf]
    %v67 = vld [vmem:[%s52 + $0xc] sm:$0xf]
    %v68 = vld [vmem:[%s52 + $0x10] sm:$0xf]
    %v69 = vld [vmem:[%s52 + $0x14] sm:$0xf]
    %v70 = vld [vmem:[%s52 + $0x18] sm:$0xf]
    %v71 = vld [vmem:[%s52 + $0x1c] sm:$0xf]
    %v72 = vld [vmem:[%s52 + $0x20] sm:$0xf]
    %v73 = vld [vmem:[%s52 + $0x24] sm:$0xf]
    %v74 = vld [vmem:[%s52 + $0x28] sm:$0xf]
    %v75 = vld [vmem:[%s52 + $0x2c] sm:$0xf]
    %v76 = vld [vmem:[%s52 + $0x30] sm:$0xf]
    %v77 = vld [vmem:[%s52 + $0x34] sm:$0xf]
    %v78 = vld [vmem:[%s52 + $0x38] sm:$0xf]
    %v79 = vld [vmem:[%s52 + $0x3c] sm:$0xf]
    %v80 = vld [vmem:[%s1] sm:$0xf]
    %v81 = vld [vmem:[%s1 + $0x4] sm:$0xf]
    %v82 = vld [vmem:[%s1 + $0x8] sm:$0xf]
    %v83 = vld [vmem:[%s1 + $0xc] sm:$0xf]
    %v84 = vld [vmem:[%s1 + $0x10] sm:$0xf]
    %v85 = vld [vmem:[%s1 + $0x14] sm:$0xf]
    %v86 = vld [vmem:[%s1 + $0x18] sm:$0xf]
    %v87 = vld [vmem:[%s1 + $0x1c] sm:$0xf]
    %v88 = vld [vmem:[%s1 + $0x20] sm:$0xf]
    %v89 = vld [vmem:[%s1 + $0x24] sm:$0xf]
    %v90 = vld [vmem:[%s1 + $0x28] sm:$0xf]
    %v91 = vld [vmem:[%s1 + $0x2c] sm:$0xf]
    %v92 = vld [vmem:[%s1 + $0x30] sm:$0xf]
    %v93 = vld [vmem:[%s1 + $0x34] sm:$0xf]
    %v94 = vld [vmem:[%s1 + $0x38] sm:$0xf]
    %v95 = vld [vmem:[%s1 + $0x3c] sm:$0xf]
    %v112 = vunpack.c.l.b16 %v64
    %v113 = vunpack.c.l.b16 %v65
    %v114 = vunpack.c.l.b16 %v66
    %v115 = vunpack.c.l.b16 %v67
    %v116 = vunpack.c.l.b16 %v68
    %v117 = vunpack.c.l.b16 %v69
    %v118 = vunpack.c.l.b16 %v70
    %v119 = vunpack.c.l.b16 %v71
    %v120 = vunpack.c.l.b16 %v72
    %v121 = vunpack.c.l.b16 %v73
    %v122 = vunpack.c.l.b16 %v74
    %v123 = vunpack.c.l.b16 %v75
    %v124 = vunpack.c.l.b16 %v76
    %v125 = vunpack.c.l.b16 %v77
    %v126 = vunpack.c.l.b16 %v78
    %v127 = vunpack.c.l.b16 %v79
    %v128 = vpack.c.b16 %v113, %v112
    %v129 = vpack.c.b16 %v115, %v114
    %v130 = vpack.c.b16 %v117, %v116
    %v131 = vpack.c.b16 %v119, %v118
    %v132 = vpack.c.b16 %v121, %v120
    %v133 = vpack.c.b16 %v123, %v122
    %v134 = vpack.c.b16 %v125, %v124
    %v135 = vpack.c.b16 %v127, %v126
    %v160 = vunpack.c.l.b16 %v80
    %v161 = vunpack.c.l.b16 %v81
    %v162 = vunpack.c.l.b16 %v82
    %v163 = vunpack.c.l.b16 %v83
    %v164 = vunpack.c.l.b16 %v84
    %v165 = vunpack.c.l.b16 %v85
    %v166 = vunpack.c.l.b16 %v86
    %v167 = vunpack.c.l.b16 %v87
    %v168 = vunpack.c.l.b16 %v88
    %v169 = vunpack.c.l.b16 %v89
    %v170 = vunpack.c.l.b16 %v90
    %v171 = vunpack.c.l.b16 %v91
    %v172 = vunpack.c.l.b16 %v92
    %v173 = vunpack.c.l.b16 %v93
    %v174 = vunpack.c.l.b16 %v94
    %v175 = vunpack.c.l.b16 %v95
    %v176 = vpack.c.b16 %v161, %v160
    %v177 = vpack.c.b16 %v163, %v162
    %v178 = vpack.c.b16 %v165, %v164
    %v179 = vpack.c.b16 %v167, %v166
    %v180 = vpack.c.b16 %v169, %v168
    %v181 = vpack.c.b16 %v171, %v170
    %v182 = vpack.c.b16 %v173, %v172
    %v183 = vpack.c.b16 %v175, %v174
    %192 = vmatprep.subr.bf16.mxu0 0
    %193 = vmatpush1.bf16.msra.mxu0 %v183
    %194 = vmatprep.subr.bf16.mxu0 0
    %195 = vmatpush1.bf16.msra.mxu0 %v182
    %196 = vmatprep.subr.bf16.mxu0 0
    %197 = vmatpush1.bf16.msra.mxu0 %v181
    %198 = vmatprep.subr.bf16.mxu0 0
    %199 = vmatpush1.bf16.msra.mxu0 %v180
    %200 = vmatprep.subr.bf16.mxu0 0
    %201 = vmatpush1.bf16.msra.mxu0 %v179
    %202 = vmatprep.subr.bf16.mxu0 0
    %203 = vmatpush1.bf16.msra.mxu0 %v178
    %204 = vmatprep.subr.bf16.mxu0 0
    %205 = vmatpush1.bf16.msra.mxu0 %v177
    %206 = vmatprep.subr.bf16.mxu0 0
    %207 = vmatpush1.bf16.msra.mxu0 %v176
    %208 = vmatprep.subr.bf16.mxu0 0
    %209 = vmatpush2.bf16.msra.mxu0 0
    %210 = vmatprep.subr.bf16.mxu0 0
    %211 = vmatpush2.bf16.msra.mxu0 0
    %212 = vmatprep.subr.bf16.mxu0 0
    %213 = vmatpush2.bf16.msra.mxu0 0
    %214 = vmatprep.subr.bf16.mxu0 0
    %215 = vmatpush2.bf16.msra.mxu0 0
    %216 = vmatprep.subr.bf16.mxu0 0
    %217 = vmatpush2.bf16.msra.mxu0 0
    %218 = vmatprep.subr.bf16.mxu0 0
    %219 = vmatpush2.bf16.msra.mxu0 0
    %220 = vmatprep.subr.bf16.mxu0 0
    %221 = vmatpush2.bf16.msra.mxu0 0
    %222 = vmatprep.subr.bf16.mxu0 0
    %223 = vmatpush2.bf16.msra.mxu0 0
    %224 = vmatprep.mubr.bf16.mxu0 0
    %225 = vmatmul.mubr.bf16.gmra.mxu0 %v128
    %v226 = vpop.f32.mrf.mxu0
    %v227 = vadd.f32 0.0, %v226
    %v228 = vpop.f32.mrf.mxu0
    %v229 = vpop.f32.mrf.mxu0
    %v230 = vadd.f32 0.0, %v229
    %v231 = vpop.f32.mrf.mxu0
    %232 = vmatprep.mubr.bf16.mxu0 0
    %233 = vmatmul.mubr.bf16.gmra.mxu0 %v129
    %v234 = vpop.f32.mrf.mxu0
    %v235 = vadd.f32 0.0, %v234
    %v236 = vpop.f32.mrf.mxu0
    %v237 = vpop.f32.mrf.mxu0
    %v238 = vadd.f32 0.0, %v237
    %v239 = vpop.f32.mrf.mxu0
    %240 = vmatprep.mubr.bf16.mxu0 0
    %241 = vmatmul.mubr.bf16.gmra.mxu0 %v130
    %v242 = vpop.f32.mrf.mxu0
    %v243 = vadd.f32 0.0, %v242
    %v244 = vpop.f32.mrf.mxu0
    %v245 = vpop.f32.mrf.mxu0
    %v246 = vadd.f32 0.0, %v245
    %v247 = vpop.f32.mrf.mxu0
    %248 = vmatprep.mubr.bf16.mxu0 0
    %249 = vmatmul.mubr.bf16.gmra.mxu0 %v131
    %v250 = vpop.f32.mrf.mxu0
    %v251 = vadd.f32 0.0, %v250
    %v252 = vpop.f32.mrf.mxu0
    %v253 = vpop.f32.mrf.mxu0
    %v254 = vadd.f32 0.0, %v253
    %v255 = vpop.f32.mrf.mxu0
    %256 = vmatprep.mubr.bf16.mxu0 0
    %257 = vmatmul.mubr.bf16.gmra.mxu0 %v132
    %v258 = vpop.f32.mrf.mxu0
    %v259 = vadd.f32 0.0, %v258
    %v260 = vpop.f32.mrf.mxu0
    %v261 = vpop.f32.mrf.mxu0
    %v262 = vadd.f32 0.0, %v261
    %v263 = vpop.f32.mrf.mxu0
    %264 = vmatprep.mubr.bf16.mxu0 0
    %265 = vmatmul.mubr.bf16.gmra.mxu0 %v133
    %v266 = vpop.f32.mrf.mxu0
    %v267 = vadd.f32 0.0, %v266
    %v268 = vpop.f32.mrf.mxu0
    %v269 = vpop.f32.mrf.mxu0
    %v270 = vadd.f32 0.0, %v269
    %v271 = vpop.f32.mrf.mxu0
    %272 = vmatprep.mubr.bf16.mxu0 0
    %273 = vmatmul.mubr.bf16.gmra.mxu0 %v134
    %v274 = vpop.f32.mrf.mxu0
    %v275 = vadd.f32 0.0, %v274
    %v276 = vpop.f32.mrf.mxu0
    %v277 = vpop.f32.mrf.mxu0
    %v278 = vadd.f32 0.0, %v277
    %v279 = vpop.f32.mrf.mxu0
    %280 = vmatprep.mubr.bf16.mxu0 0
    %281 = vmatmul.mubr.bf16.gmra.mxu0 %v135
    %v282 = vpop.f32.mrf.mxu0
    %v283 = vadd.f32 0.0, %v282
    %v284 = vpop.f32.mrf.mxu0
    %v285 = vpop.f32.mrf.mxu0
    %v286 = vadd.f32 0.0, %v285
    %v287 = vpop.f32.mrf.mxu0
    %288 = vdwg.mxu0
    %v289 = vld [vmem:[#allocation3] sm:$0xff]
    %v290 = vld [vmem:[#allocation3 + $0x8] sm:$0xff]
    %v291 = vld [vmem:[#allocation3 + $0x10] sm:$0xff]
    %v292 = vld [vmem:[#allocation3 + $0x18] sm:$0xff]
    %v293 = vld [vmem:[#allocation3 + $0x20] sm:$0xff]
    %v294 = vld [vmem:[#allocation3 + $0x28] sm:$0xff]
    %v295 = vld [vmem:[#allocation3 + $0x30] sm:$0xff]
    %v296 = vld [vmem:[#allocation3 + $0x38] sm:$0xff]
    %v297 = vld [vmem:[#allocation3 + $0x40] sm:$0xff]
    %v298 = vld [vmem:[#allocation3 + $0x48] sm:$0xff]
    %v299 = vld [vmem:[#allocation3 + $0x50] sm:$0xff]
    %v300 = vld [vmem:[#allocation3 + $0x58] sm:$0xff]
    %v301 = vld [vmem:[#allocation3 + $0x60] sm:$0xff]
    %v302 = vld [vmem:[#allocation3 + $0x68] sm:$0xff]
    %v303 = vld [vmem:[#allocation3 + $0x70] sm:$0xff]
    %v304 = vld [vmem:[#allocation3 + $0x78] sm:$0xff]
    %306 = vset.pattern.permute.xlu0 0
    %307 = vperm.xlu0 %306, %v227
    %v308 = vpop.permute.xlu0 %307
    %311 = vset.pattern.permute.xlu0 0
    %312 = vperm.xlu0 %311, %v230
    %v313 = vpop.permute.xlu0 %312
    %316 = vset.pattern.permute.xlu0 0
    %317 = vperm.xlu0 %316, %v235
    %v318 = vpop.permute.xlu0 %317
    %321 = vset.pattern.permute.xlu0 0
    %322 = vperm.xlu0 %321, %v238
    %v323 = vpop.permute.xlu0 %322
    %326 = vset.pattern.permute.xlu0 0
    %327 = vperm.xlu0 %326, %v243
    %v328 = vpop.permute.xlu0 %327
    %331 = vset.pattern.permute.xlu0 0
    %332 = vperm.xlu0 %331, %v246
    %v333 = vpop.permute.xlu0 %332
    %336 = vset.pattern.permute.xlu0 0
    %337 = vperm.xlu0 %336, %v251
    %v338 = vpop.permute.xlu0 %337
    %341 = vset.pattern.permute.xlu0 0
    %342 = vperm.xlu0 %341, %v254
    %v343 = vpop.permute.xlu0 %342
    %346 = vset.pattern.permute.xlu0 0
    %347 = vperm.xlu0 %346, %v259
    %v348 = vpop.permute.xlu0 %347
    %351 = vset.pattern.permute.xlu0 0
    %352 = vperm.xlu0 %351, %v262
    %v353 = vpop.permute.xlu0 %352
    %356 = vset.pattern.permute.xlu0 0
    %357 = vperm.xlu0 %356, %v267
    %v358 = vpop.permute.xlu0 %357
    %361 = vset.pattern.permute.xlu0 0
    %362 = vperm.xlu0 %361, %v270
    %v363 = vpop.permute.xlu0 %362
    %366 = vset.pattern.permute.xlu0 0
    %367 = vperm.xlu0 %366, %v275
    %v368 = vpop.permute.xlu0 %367
    %371 = vset.pattern.permute.xlu0 0
    %372 = vperm.xlu0 %371, %v278
    %v373 = vpop.permute.xlu0 %372
    %376 = vset.pattern.permute.xlu0 0
    %377 = vperm.xlu0 %376, %v283
    %v378 = vpop.permute.xlu0 %377
    %381 = vset.pattern.permute.xlu0 0
    %382 = vperm.xlu0 %381, %v286
    %v383 = vpop.permute.xlu0 %382
    %v385 = vmul.f32 %v308, %v289
    %v386 = vmul.f32 %v313, %v290
    %v387 = vmul.f32 %v318, %v291
    %v388 = vmul.f32 %v323, %v292
    %v389 = vmul.f32 %v328, %v293
    %v390 = vmul.f32 %v333, %v294
    %v391 = vmul.f32 %v338, %v295
    %v392 = vmul.f32 %v343, %v296
    %v393 = vmul.f32 %v348, %v297
    %v394 = vmul.f32 %v353, %v298
    %v395 = vmul.f32 %v358, %v299
    %v396 = vmul.f32 %v363, %v300
    %v397 = vmul.f32 %v368, %v301
    %v398 = vmul.f32 %v373, %v302
    %v399 = vmul.f32 %v378, %v303
    %v400 = vmul.f32 %v383, %v304
    %401 = vset.pattern.permute.xlu0 1
    %402 = vperm.xlu0 %401, %v227
    %v403 = vpop.permute.xlu0 %402
    %405 = vset.pattern.permute.xlu0 1
    %406 = vperm.xlu0 %405, %v230
    %v407 = vpop.permute.xlu0 %406
    %409 = vset.pattern.permute.xlu0 1
    %410 = vperm.xlu0 %409, %v235
    %v411 = vpop.permute.xlu0 %410
    %413 = vset.pattern.permute.xlu0 1
    %414 = vperm.xlu0 %413, %v238
    %v415 = vpop.permute.xlu0 %414
    %417 = vset.pattern.permute.xlu0 1
    %418 = vperm.xlu0 %417, %v243
    %v419 = vpop.permute.xlu0 %418
    %421 = vset.pattern.permute.xlu0 1
    %422 = vperm.xlu0 %421, %v246
    %v423 = vpop.permute.xlu0 %422
    %425 = vset.pattern.permute.xlu0 1
    %426 = vperm.xlu0 %425, %v251
    %v427 = vpop.permute.xlu0 %426
    %429 = vset.pattern.permute.xlu0 1
    %430 = vperm.xlu0 %429, %v254
    %v431 = vpop.permute.xlu0 %430
    %433 = vset.pattern.permute.xlu0 1
    %434 = vperm.xlu0 %433, %v259
    %v435 = vpop.permute.xlu0 %434
    %437 = vset.pattern.permute.xlu0 1
    %438 = vperm.xlu0 %437, %v262
    %v439 = vpop.permute.xlu0 %438
    %441 = vset.pattern.permute.xlu0 1
    %442 = vperm.xlu0 %441, %v267
    %v443 = vpop.permute.xlu0 %442
    %445 = vset.pattern.permute.xlu0 1
    %446 = vperm.xlu0 %445, %v270
    %v447 = vpop.permute.xlu0 %446
    %449 = vset.pattern.permute.xlu0 1
    %450 = vperm.xlu0 %449, %v275
    %v451 = vpop.permute.xlu0 %450
    %453 = vset.pattern.permute.xlu0 1
    %454 = vperm.xlu0 %453, %v278
    %v455 = vpop.permute.xlu0 %454
    %457 = vset.pattern.permute.xlu0 1
    %458 = vperm.xlu0 %457, %v283
    %v459 = vpop.permute.xlu0 %458
    %461 = vset.pattern.permute.xlu0 1
    %462 = vperm.xlu0 %461, %v286
    %v463 = vpop.permute.xlu0 %462
    %v465 = vmul.f32 %v403, %v289
    %v466 = vmul.f32 %v407, %v290
    %v467 = vmul.f32 %v411, %v291
    %v468 = vmul.f32 %v415, %v292
    %v469 = vmul.f32 %v419, %v293
    %v470 = vmul.f32 %v423, %v294
    %v471 = vmul.f32 %v427, %v295
    %v472 = vmul.f32 %v431, %v296
    %v473 = vmul.f32 %v435, %v297
    %v474 = vmul.f32 %v439, %v298
    %v475 = vmul.f32 %v443, %v299
    %v476 = vmul.f32 %v447, %v300
    %v477 = vmul.f32 %v451, %v301
    %v478 = vmul.f32 %v455, %v302
    %v479 = vmul.f32 %v459, %v303
    %v480 = vmul.f32 %v463, %v304
    %497 = vrot.lane.b32.xlu0 %v465, 112
    %v498 = vpop.permute.xlu0 %497
    %499 = vrot.lane.b32.xlu0 %v466, 112
    %v500 = vpop.permute.xlu0 %499
    %501 = vrot.lane.b32.xlu0 %v467, 112
    %v502 = vpop.permute.xlu0 %501
    %503 = vrot.lane.b32.xlu0 %v468, 112
    %v504 = vpop.permute.xlu0 %503
    %505 = vrot.lane.b32.xlu0 %v469, 112
    %v506 = vpop.permute.xlu0 %505
    %507 = vrot.lane.b32.xlu0 %v470, 112
    %v508 = vpop.permute.xlu0 %507
    %509 = vrot.lane.b32.xlu0 %v471, 112
    %v510 = vpop.permute.xlu0 %509
    %511 = vrot.lane.b32.xlu0 %v472, 112
    %v512 = vpop.permute.xlu0 %511
    %513 = vrot.lane.b32.xlu0 %v473, 112
    %v514 = vpop.permute.xlu0 %513
    %515 = vrot.lane.b32.xlu0 %v474, 112
    %v516 = vpop.permute.xlu0 %515
    %517 = vrot.lane.b32.xlu0 %v475, 112
    %v518 = vpop.permute.xlu0 %517
    %519 = vrot.lane.b32.xlu0 %v476, 112
    %v520 = vpop.permute.xlu0 %519
    %521 = vrot.lane.b32.xlu0 %v477, 112
    %v522 = vpop.permute.xlu0 %521
    %523 = vrot.lane.b32.xlu0 %v478, 112
    %v524 = vpop.permute.xlu0 %523
    %525 = vrot.lane.b32.xlu0 %v479, 112
    %v526 = vpop.permute.xlu0 %525
    %527 = vrot.lane.b32.xlu0 %v480, 112
    %v528 = vpop.permute.xlu0 %527
    %v545 = vadd.f32 %v385, %v498
    %v546 = vadd.f32 %v386, %v500
    %v547 = vadd.f32 %v387, %v502
    %v548 = vadd.f32 %v388, %v504
    %v549 = vadd.f32 %v389, %v506
    %v550 = vadd.f32 %v390, %v508
    %v551 = vadd.f32 %v391, %v510
    %v552 = vadd.f32 %v392, %v512
    %v553 = vadd.f32 %v393, %v514
    %v554 = vadd.f32 %v394, %v516
    %v555 = vadd.f32 %v395, %v518
    %v556 = vadd.f32 %v396, %v520
    %v557 = vadd.f32 %v397, %v522
    %v558 = vadd.f32 %v398, %v524
    %v559 = vadd.f32 %v399, %v526
    %v560 = vadd.f32 %v400, %v528
    %561 = vset.pattern.permute.xlu0 2
    %562 = vperm.xlu0 %561, %v227
    %v563 = vpop.permute.xlu0 %562
    %565 = vset.pattern.permute.xlu0 2
    %566 = vperm.xlu0 %565, %v230
    %v567 = vpop.permute.xlu0 %566
    %569 = vset.pattern.permute.xlu0 2
    %570 = vperm.xlu0 %569, %v235
    %v571 = vpop.permute.xlu0 %570
    %573 = vset.pattern.permute.xlu0 2
    %574 = vperm.xlu0 %573, %v238
    %v575 = vpop.permute.xlu0 %574
    %577 = vset.pattern.permute.xlu0 2
    %578 = vperm.xlu0 %577, %v243
    %v579 = vpop.permute.xlu0 %578
    %581 = vset.pattern.permute.xlu0 2
    %582 = vperm.xlu0 %581, %v246
    %v583 = vpop.permute.xlu0 %582
    %585 = vset.pattern.permute.xlu0 2
    %586 = vperm.xlu0 %585, %v251
    %v587 = vpop.permute.xlu0 %586
    %589 = vset.pattern.permute.xlu0 2
    %590 = vperm.xlu0 %589, %v254
    %v591 = vpop.permute.xlu0 %590
    %593 = vset.pattern.permute.xlu0 2
    %594 = vperm.xlu0 %593, %v259
    %v595 = vpop.permute.xlu0 %594
    %597 = vset.pattern.permute.xlu0 2
    %598 = vperm.xlu0 %597, %v262
    %v599 = vpop.permute.xlu0 %598
    %601 = vset.pattern.permute.xlu0 2
    %602 = vperm.xlu0 %601, %v267
    %v603 = vpop.permute.xlu0 %602
    %605 = vset.pattern.permute.xlu0 2
    %606 = vperm.xlu0 %605, %v270
    %v607 = vpop.permute.xlu0 %606
    %609 = vset.pattern.permute.xlu0 2
    %610 = vperm.xlu0 %609, %v275
    %v611 = vpop.permute.xlu0 %610
    %613 = vset.pattern.permute.xlu0 2
    %614 = vperm.xlu0 %613, %v278
    %v615 = vpop.permute.xlu0 %614
    %617 = vset.pattern.permute.xlu0 2
    %618 = vperm.xlu0 %617, %v283
    %v619 = vpop.permute.xlu0 %618
    %621 = vset.pattern.permute.xlu0 2
    %622 = vperm.xlu0 %621, %v286
    %v623 = vpop.permute.xlu0 %622
    %v625 = vmul.f32 %v563, %v289
    %v626 = vmul.f32 %v567, %v290
    %v627 = vmul.f32 %v571, %v291
    %v628 = vmul.f32 %v575, %v292
    %v629 = vmul.f32 %v579, %v293
    %v630 = vmul.f32 %v583, %v294
    %v631 = vmul.f32 %v587, %v295
    %v632 = vmul.f32 %v591, %v296
    %v633 = vmul.f32 %v595, %v297
    %v634 = vmul.f32 %v599, %v298
    %v635 = vmul.f32 %v603, %v299
    %v636 = vmul.f32 %v607, %v300
    %v637 = vmul.f32 %v611, %v301
    %v638 = vmul.f32 %v615, %v302
    %v639 = vmul.f32 %v619, %v303
    %v640 = vmul.f32 %v623, %v304
    %657 = vrot.lane.b32.xlu0 %v625, 96
    %v658 = vpop.permute.xlu0 %657
    %659 = vrot.lane.b32.xlu0 %v626, 96
    %v660 = vpop.permute.xlu0 %659
    %661 = vrot.lane.b32.xlu0 %v627, 96
    %v662 = vpop.permute.xlu0 %661
    %663 = vrot.lane.b32.xlu0 %v628, 96
    %v664 = vpop.permute.xlu0 %663
    %665 = vrot.lane.b32.xlu0 %v629, 96
    %v666 = vpop.permute.xlu0 %665
    %667 = vrot.lane.b32.xlu0 %v630, 96
    %v668 = vpop.permute.xlu0 %667
    %669 = vrot.lane.b32.xlu0 %v631, 96
    %v670 = vpop.permute.xlu0 %669
    %671 = vrot.lane.b32.xlu0 %v632, 96
    %v672 = vpop.permute.xlu0 %671
    %673 = vrot.lane.b32.xlu0 %v633, 96
    %v674 = vpop.permute.xlu0 %673
    %675 = vrot.lane.b32.xlu0 %v634, 96
    %v676 = vpop.permute.xlu0 %675
    %677 = vrot.lane.b32.xlu0 %v635, 96
    %v678 = vpop.permute.xlu0 %677
    %679 = vrot.lane.b32.xlu0 %v636, 96
    %v680 = vpop.permute.xlu0 %679
    %681 = vrot.lane.b32.xlu0 %v637, 96
    %v682 = vpop.permute.xlu0 %681
    %683 = vrot.lane.b32.xlu0 %v638, 96
    %v684 = vpop.permute.xlu0 %683
    %685 = vrot.lane.b32.xlu0 %v639, 96
    %v686 = vpop.permute.xlu0 %685
    %687 = vrot.lane.b32.xlu0 %v640, 96
    %v688 = vpop.permute.xlu0 %687
    %v705 = vadd.f32 %v545, %v658
    %v706 = vadd.f32 %v546, %v660
    %v707 = vadd.f32 %v547, %v662
    %v708 = vadd.f32 %v548, %v664
    %v709 = vadd.f32 %v549, %v666
    %v710 = vadd.f32 %v550, %v668
    %v711 = vadd.f32 %v551, %v670
    %v712 = vadd.f32 %v552, %v672
    %v713 = vadd.f32 %v553, %v674
    %v714 = vadd.f32 %v554, %v676
    %v715 = vadd.f32 %v555, %v678
    %v716 = vadd.f32 %v556, %v680
    %v717 = vadd.f32 %v557, %v682
    %v718 = vadd.f32 %v558, %v684
    %v719 = vadd.f32 %v559, %v686
    %v720 = vadd.f32 %v560, %v688
    %721 = vset.pattern.permute.xlu0 3
    %722 = vperm.xlu0 %721, %v227
    %v723 = vpop.permute.xlu0 %722
    %725 = vset.pattern.permute.xlu0 3
    %726 = vperm.xlu0 %725, %v230
    %v727 = vpop.permute.xlu0 %726
    %729 = vset.pattern.permute.xlu0 3
    %730 = vperm.xlu0 %729, %v235
    %v731 = vpop.permute.xlu0 %730
    %733 = vset.pattern.permute.xlu0 3
    %734 = vperm.xlu0 %733, %v238
    %v735 = vpop.permute.xlu0 %734
    %737 = vset.pattern.permute.xlu0 3
    %738 = vperm.xlu0 %737, %v243
    %v739 = vpop.permute.xlu0 %738
    %741 = vset.pattern.permute.xlu0 3
    %742 = vperm.xlu0 %741, %v246
    %v743 = vpop.permute.xlu0 %742
    %745 = vset.pattern.permute.xlu0 3
    %746 = vperm.xlu0 %745, %v251
    %v747 = vpop.permute.xlu0 %746
    %749 = vset.pattern.permute.xlu0 3
    %750 = vperm.xlu0 %749, %v254
    %v751 = vpop.permute.xlu0 %750
    %753 = vset.pattern.permute.xlu0 3
    %754 = vperm.xlu0 %753, %v259
    %v755 = vpop.permute.xlu0 %754
    %757 = vset.pattern.permute.xlu0 3
    %758 = vperm.xlu0 %757, %v262
    %v759 = vpop.permute.xlu0 %758
    %761 = vset.pattern.permute.xlu0 3
    %762 = vperm.xlu0 %761, %v267
    %v763 = vpop.permute.xlu0 %762
    %765 = vset.pattern.permute.xlu0 3
    %766 = vperm.xlu0 %765, %v270
    %v767 = vpop.permute.xlu0 %766
    %769 = vset.pattern.permute.xlu0 3
    %770 = vperm.xlu0 %769, %v275
    %v771 = vpop.permute.xlu0 %770
    %773 = vset.pattern.permute.xlu0 3
    %774 = vperm.xlu0 %773, %v278
    %v775 = vpop.permute.xlu0 %774
    %777 = vset.pattern.permute.xlu0 3
    %778 = vperm.xlu0 %777, %v283
    %v779 = vpop.permute.xlu0 %778
    %781 = vset.pattern.permute.xlu0 3
    %782 = vperm.xlu0 %781, %v286
    %v783 = vpop.permute.xlu0 %782
    %v785 = vmul.f32 %v723, %v289
    %v786 = vmul.f32 %v727, %v290
    %v787 = vmul.f32 %v731, %v291
    %v788 = vmul.f32 %v735, %v292
    %v789 = vmul.f32 %v739, %v293
    %v790 = vmul.f32 %v743, %v294
    %v791 = vmul.f32 %v747, %v295
    %v792 = vmul.f32 %v751, %v296
    %v793 = vmul.f32 %v755, %v297
    %v794 = vmul.f32 %v759, %v298
    %v795 = vmul.f32 %v763, %v299
    %v796 = vmul.f32 %v767, %v300
    %v797 = vmul.f32 %v771, %v301
    %v798 = vmul.f32 %v775, %v302
    %v799 = vmul.f32 %v779, %v303
    %v800 = vmul.f32 %v783, %v304
    %817 = vrot.lane.b32.xlu0 %v785, 80
    %v818 = vpop.permute.xlu0 %817
    %819 = vrot.lane.b32.xlu0 %v786, 80
    %v820 = vpop.permute.xlu0 %819
    %821 = vrot.lane.b32.xlu0 %v787, 80
    %v822 = vpop.permute.xlu0 %821
    %823 = vrot.lane.b32.xlu0 %v788, 80
    %v824 = vpop.permute.xlu0 %823
    %825 = vrot.lane.b32.xlu0 %v789, 80
    %v826 = vpop.permute.xlu0 %825
    %827 = vrot.lane.b32.xlu0 %v790, 80
    %v828 = vpop.permute.xlu0 %827
    %829 = vrot.lane.b32.xlu0 %v791, 80
    %v830 = vpop.permute.xlu0 %829
    %831 = vrot.lane.b32.xlu0 %v792, 80
    %v832 = vpop.permute.xlu0 %831
    %833 = vrot.lane.b32.xlu0 %v793, 80
    %v834 = vpop.permute.xlu0 %833
    %835 = vrot.lane.b32.xlu0 %v794, 80
    %v836 = vpop.permute.xlu0 %835
    %837 = vrot.lane.b32.xlu0 %v795, 80
    %v838 = vpop.permute.xlu0 %837
    %839 = vrot.lane.b32.xlu0 %v796, 80
    %v840 = vpop.permute.xlu0 %839
    %841 = vrot.lane.b32.xlu0 %v797, 80
    %v842 = vpop.permute.xlu0 %841
    %843 = vrot.lane.b32.xlu0 %v798, 80
    %v844 = vpop.permute.xlu0 %843
    %845 = vrot.lane.b32.xlu0 %v799, 80
    %v846 = vpop.permute.xlu0 %845
    %847 = vrot.lane.b32.xlu0 %v800, 80
    %v848 = vpop.permute.xlu0 %847
    %v865 = vadd.f32 %v705, %v818
    %v866 = vadd.f32 %v706, %v820
    %v867 = vadd.f32 %v707, %v822
    %v868 = vadd.f32 %v708, %v824
    %v869 = vadd.f32 %v709, %v826
    %v870 = vadd.f32 %v710, %v828
    %v871 = vadd.f32 %v711, %v830
    %v872 = vadd.f32 %v712, %v832
    %v873 = vadd.f32 %v713, %v834
    %v874 = vadd.f32 %v714, %v836
    %v875 = vadd.f32 %v715, %v838
    %v876 = vadd.f32 %v716, %v840
    %v877 = vadd.f32 %v717, %v842
    %v878 = vadd.f32 %v718, %v844
    %v879 = vadd.f32 %v719, %v846
    %v880 = vadd.f32 %v720, %v848
    %881 = vset.pattern.permute.xlu0 4
    %882 = vperm.xlu0 %881, %v227
    %v883 = vpop.permute.xlu0 %882
    %885 = vset.pattern.permute.xlu0 4
    %886 = vperm.xlu0 %885, %v230
    %v887 = vpop.permute.xlu0 %886
    %889 = vset.pattern.permute.xlu0 4
    %890 = vperm.xlu0 %889, %v235
    %v891 = vpop.permute.xlu0 %890
    %893 = vset.pattern.permute.xlu0 4
    %894 = vperm.xlu0 %893, %v238
    %v895 = vpop.permute.xlu0 %894
    %897 = vset.pattern.permute.xlu0 4
    %898 = vperm.xlu0 %897, %v243
    %v899 = vpop.permute.xlu0 %898
    %901 = vset.pattern.permute.xlu0 4
    %902 = vperm.xlu0 %901, %v246
    %v903 = vpop.permute.xlu0 %902
    %905 = vset.pattern.permute.xlu0 4
    %906 = vperm.xlu0 %905, %v251
    %v907 = vpop.permute.xlu0 %906
    %909 = vset.pattern.permute.xlu0 4
    %910 = vperm.xlu0 %909, %v254
    %v911 = vpop.permute.xlu0 %910
    %913 = vset.pattern.permute.xlu0 4
    %914 = vperm.xlu0 %913, %v259
    %v915 = vpop.permute.xlu0 %914
    %917 = vset.pattern.permute.xlu0 4
    %918 = vperm.xlu0 %917, %v262
    %v919 = vpop.permute.xlu0 %918
    %921 = vset.pattern.permute.xlu0 4
    %922 = vperm.xlu0 %921, %v267
    %v923 = vpop.permute.xlu0 %922
    %925 = vset.pattern.permute.xlu0 4
    %926 = vperm.xlu0 %925, %v270
    %v927 = vpop.permute.xlu0 %926
    %929 = vset.pattern.permute.xlu0 4
    %930 = vperm.xlu0 %929, %v275
    %v931 = vpop.permute.xlu0 %930
    %933 = vset.pattern.permute.xlu0 4
    %934 = vperm.xlu0 %933, %v278
    %v935 = vpop.permute.xlu0 %934
    %937 = vset.pattern.permute.xlu0 4
    %938 = vperm.xlu0 %937, %v283
    %v939 = vpop.permute.xlu0 %938
    %941 = vset.pattern.permute.xlu0 4
    %942 = vperm.xlu0 %941, %v286
    %v943 = vpop.permute.xlu0 %942
    %v945 = vmul.f32 %v883, %v289
    %v946 = vmul.f32 %v887, %v290
    %v947 = vmul.f32 %v891, %v291
    %v948 = vmul.f32 %v895, %v292
    %v949 = vmul.f32 %v899, %v293
    %v950 = vmul.f32 %v903, %v294
    %v951 = vmul.f32 %v907, %v295
    %v952 = vmul.f32 %v911, %v296
    %v953 = vmul.f32 %v915, %v297
    %v954 = vmul.f32 %v919, %v298
    %v955 = vmul.f32 %v923, %v299
    %v956 = vmul.f32 %v927, %v300
    %v957 = vmul.f32 %v931, %v301
    %v958 = vmul.f32 %v935, %v302
    %v959 = vmul.f32 %v939, %v303
    %v960 = vmul.f32 %v943, %v304
    %977 = vrot.lane.b32.xlu0 %v945, 64
    %v978 = vpop.permute.xlu0 %977
    %979 = vrot.lane.b32.xlu0 %v946, 64
    %v980 = vpop.permute.xlu0 %979
    %981 = vrot.lane.b32.xlu0 %v947, 64
    %v982 = vpop.permute.xlu0 %981
    %983 = vrot.lane.b32.xlu0 %v948, 64
    %v984 = vpop.permute.xlu0 %983
    %985 = vrot.lane.b32.xlu0 %v949, 64
    %v986 = vpop.permute.xlu0 %985
    %987 = vrot.lane.b32.xlu0 %v950, 64
    %v988 = vpop.permute.xlu0 %987
    %989 = vrot.lane.b32.xlu0 %v951, 64
    %v990 = vpop.permute.xlu0 %989
    %991 = vrot.lane.b32.xlu0 %v952, 64
    %v992 = vpop.permute.xlu0 %991
    %993 = vrot.lane.b32.xlu0 %v953, 64
    %v994 = vpop.permute.xlu0 %993
    %995 = vrot.lane.b32.xlu0 %v954, 64
    %v996 = vpop.permute.xlu0 %995
    %997 = vrot.lane.b32.xlu0 %v955, 64
    %v998 = vpop.permute.xlu0 %997
    %999 = vrot.lane.b32.xlu0 %v956, 64
    %v1000 = vpop.permute.xlu0 %999
    %1001 = vrot.lane.b32.xlu0 %v957, 64
    %v1002 = vpop.permute.xlu0 %1001
    %1003 = vrot.lane.b32.xlu0 %v958, 64
    %v1004 = vpop.permute.xlu0 %1003
    %1005 = vrot.lane.b32.xlu0 %v959, 64
    %v1006 = vpop.permute.xlu0 %1005
    %1007 = vrot.lane.b32.xlu0 %v960, 64
    %v1008 = vpop.permute.xlu0 %1007
    %v1025 = vadd.f32 %v865, %v978
    %v1026 = vadd.f32 %v866, %v980
    %v1027 = vadd.f32 %v867, %v982
    %v1028 = vadd.f32 %v868, %v984
    %v1029 = vadd.f32 %v869, %v986
    %v1030 = vadd.f32 %v870, %v988
    %v1031 = vadd.f32 %v871, %v990
    %v1032 = vadd.f32 %v872, %v992
    %v1033 = vadd.f32 %v873, %v994
    %v1034 = vadd.f32 %v874, %v996
    %v1035 = vadd.f32 %v875, %v998
    %v1036 = vadd.f32 %v876, %v1000
    %v1037 = vadd.f32 %v877, %v1002
    %v1038 = vadd.f32 %v878, %v1004
    %v1039 = vadd.f32 %v879, %v1006
    %v1040 = vadd.f32 %v880, %v1008
    %1041 = vset.pattern.permute.xlu0 5
    %1042 = vperm.xlu0 %1041, %v227
    %v1043 = vpop.permute.xlu0 %1042
    %1045 = vset.pattern.permute.xlu0 5
    %1046 = vperm.xlu0 %1045, %v230
    %v1047 = vpop.permute.xlu0 %1046
    %1049 = vset.pattern.permute.xlu0 5
    %1050 = vperm.xlu0 %1049, %v235
    %v1051 = vpop.permute.xlu0 %1050
    %1053 = vset.pattern.permute.xlu0 5
    %1054 = vperm.xlu0 %1053, %v238
    %v1055 = vpop.permute.xlu0 %1054
    %1057 = vset.pattern.permute.xlu0 5
    %1058 = vperm.xlu0 %1057, %v243
    %v1059 = vpop.permute.xlu0 %1058
    %1061 = vset.pattern.permute.xlu0 5
    %1062 = vperm.xlu0 %1061, %v246
    %v1063 = vpop.permute.xlu0 %1062
    %1065 = vset.pattern.permute.xlu0 5
    %1066 = vperm.xlu0 %1065, %v251
    %v1067 = vpop.permute.xlu0 %1066
    %1069 = vset.pattern.permute.xlu0 5
    %1070 = vperm.xlu0 %1069, %v254
    %v1071 = vpop.permute.xlu0 %1070
    %1073 = vset.pattern.permute.xlu0 5
    %1074 = vperm.xlu0 %1073, %v259
    %v1075 = vpop.permute.xlu0 %1074
    %1077 = vset.pattern.permute.xlu0 5
    %1078 = vperm.xlu0 %1077, %v262
    %v1079 = vpop.permute.xlu0 %1078
    %1081 = vset.pattern.permute.xlu0 5
    %1082 = vperm.xlu0 %1081, %v267
    %v1083 = vpop.permute.xlu0 %1082
    %1085 = vset.pattern.permute.xlu0 5
    %1086 = vperm.xlu0 %1085, %v270
    %v1087 = vpop.permute.xlu0 %1086
    %1089 = vset.pattern.permute.xlu0 5
    %1090 = vperm.xlu0 %1089, %v275
    %v1091 = vpop.permute.xlu0 %1090
    %1093 = vset.pattern.permute.xlu0 5
    %1094 = vperm.xlu0 %1093, %v278
    %v1095 = vpop.permute.xlu0 %1094
    %1097 = vset.pattern.permute.xlu0 5
    %1098 = vperm.xlu0 %1097, %v283
    %v1099 = vpop.permute.xlu0 %1098
    %1101 = vset.pattern.permute.xlu0 5
    %1102 = vperm.xlu0 %1101, %v286
    %v1103 = vpop.permute.xlu0 %1102
    %v1105 = vmul.f32 %v1043, %v289
    %v1106 = vmul.f32 %v1047, %v290
    %v1107 = vmul.f32 %v1051, %v291
    %v1108 = vmul.f32 %v1055, %v292
    %v1109 = vmul.f32 %v1059, %v293
    %v1110 = vmul.f32 %v1063, %v294
    %v1111 = vmul.f32 %v1067, %v295
    %v1112 = vmul.f32 %v1071, %v296
    %v1113 = vmul.f32 %v1075, %v297
    %v1114 = vmul.f32 %v1079, %v298
    %v1115 = vmul.f32 %v1083, %v299
    %v1116 = vmul.f32 %v1087, %v300
    %v1117 = vmul.f32 %v1091, %v301
    %v1118 = vmul.f32 %v1095, %v302
    %v1119 = vmul.f32 %v1099, %v303
    %v1120 = vmul.f32 %v1103, %v304
    %1137 = vrot.lane.b32.xlu0 %v1105, 48
    %v1138 = vpop.permute.xlu0 %1137
    %1139 = vrot.lane.b32.xlu0 %v1106, 48
    %v1140 = vpop.permute.xlu0 %1139
    %1141 = vrot.lane.b32.xlu0 %v1107, 48
    %v1142 = vpop.permute.xlu0 %1141
    %1143 = vrot.lane.b32.xlu0 %v1108, 48
    %v1144 = vpop.permute.xlu0 %1143
    %1145 = vrot.lane.b32.xlu0 %v1109, 48
    %v1146 = vpop.permute.xlu0 %1145
    %1147 = vrot.lane.b32.xlu0 %v1110, 48
    %v1148 = vpop.permute.xlu0 %1147
    %1149 = vrot.lane.b32.xlu0 %v1111, 48
    %v1150 = vpop.permute.xlu0 %1149
    %1151 = vrot.lane.b32.xlu0 %v1112, 48
    %v1152 = vpop.permute.xlu0 %1151
    %1153 = vrot.lane.b32.xlu0 %v1113, 48
    %v1154 = vpop.permute.xlu0 %1153
    %1155 = vrot.lane.b32.xlu0 %v1114, 48
    %v1156 = vpop.permute.xlu0 %1155
    %1157 = vrot.lane.b32.xlu0 %v1115, 48
    %v1158 = vpop.permute.xlu0 %1157
    %1159 = vrot.lane.b32.xlu0 %v1116, 48
    %v1160 = vpop.permute.xlu0 %1159
    %1161 = vrot.lane.b32.xlu0 %v1117, 48
    %v1162 = vpop.permute.xlu0 %1161
    %1163 = vrot.lane.b32.xlu0 %v1118, 48
    %v1164 = vpop.permute.xlu0 %1163
    %1165 = vrot.lane.b32.xlu0 %v1119, 48
    %v1166 = vpop.permute.xlu0 %1165
    %1167 = vrot.lane.b32.xlu0 %v1120, 48
    %v1168 = vpop.permute.xlu0 %1167
    %v1185 = vadd.f32 %v1025, %v1138
    %v1186 = vadd.f32 %v1026, %v1140
    %v1187 = vadd.f32 %v1027, %v1142
    %v1188 = vadd.f32 %v1028, %v1144
    %v1189 = vadd.f32 %v1029, %v1146
    %v1190 = vadd.f32 %v1030, %v1148
    %v1191 = vadd.f32 %v1031, %v1150
    %v1192 = vadd.f32 %v1032, %v1152
    %v1193 = vadd.f32 %v1033, %v1154
    %v1194 = vadd.f32 %v1034, %v1156
    %v1195 = vadd.f32 %v1035, %v1158
    %v1196 = vadd.f32 %v1036, %v1160
    %v1197 = vadd.f32 %v1037, %v1162
    %v1198 = vadd.f32 %v1038, %v1164
    %v1199 = vadd.f32 %v1039, %v1166
    %v1200 = vadd.f32 %v1040, %v1168
    %1201 = vset.pattern.permute.xlu0 6
    %1202 = vperm.xlu0 %1201, %v227
    %v1203 = vpop.permute.xlu0 %1202
    %1205 = vset.pattern.permute.xlu0 6
    %1206 = vperm.xlu0 %1205, %v230
    %v1207 = vpop.permute.xlu0 %1206
    %1209 = vset.pattern.permute.xlu0 6
    %1210 = vperm.xlu0 %1209, %v235
    %v1211 = vpop.permute.xlu0 %1210
    %1213 = vset.pattern.permute.xlu0 6
    %1214 = vperm.xlu0 %1213, %v238
    %v1215 = vpop.permute.xlu0 %1214
    %1217 = vset.pattern.permute.xlu0 6
    %1218 = vperm.xlu0 %1217, %v243
    %v1219 = vpop.permute.xlu0 %1218
    %1221 = vset.pattern.permute.xlu0 6
    %1222 = vperm.xlu0 %1221, %v246
    %v1223 = vpop.permute.xlu0 %1222
    %1225 = vset.pattern.permute.xlu0 6
    %1226 = vperm.xlu0 %1225, %v251
    %v1227 = vpop.permute.xlu0 %1226
    %1229 = vset.pattern.permute.xlu0 6
    %1230 = vperm.xlu0 %1229, %v254
    %v1231 = vpop.permute.xlu0 %1230
    %1233 = vset.pattern.permute.xlu0 6
    %1234 = vperm.xlu0 %1233, %v259
    %v1235 = vpop.permute.xlu0 %1234
    %1237 = vset.pattern.permute.xlu0 6
    %1238 = vperm.xlu0 %1237, %v262
    %v1239 = vpop.permute.xlu0 %1238
    %1241 = vset.pattern.permute.xlu0 6
    %1242 = vperm.xlu0 %1241, %v267
    %v1243 = vpop.permute.xlu0 %1242
    %1245 = vset.pattern.permute.xlu0 6
    %1246 = vperm.xlu0 %1245, %v270
    %v1247 = vpop.permute.xlu0 %1246
    %1249 = vset.pattern.permute.xlu0 6
    %1250 = vperm.xlu0 %1249, %v275
    %v1251 = vpop.permute.xlu0 %1250
    %1253 = vset.pattern.permute.xlu0 6
    %1254 = vperm.xlu0 %1253, %v278
    %v1255 = vpop.permute.xlu0 %1254
    %1257 = vset.pattern.permute.xlu0 6
    %1258 = vperm.xlu0 %1257, %v283
    %v1259 = vpop.permute.xlu0 %1258
    %1261 = vset.pattern.permute.xlu0 6
    %1262 = vperm.xlu0 %1261, %v286
    %v1263 = vpop.permute.xlu0 %1262
    %v1265 = vmul.f32 %v1203, %v289
    %v1266 = vmul.f32 %v1207, %v290
    %v1267 = vmul.f32 %v1211, %v291
    %v1268 = vmul.f32 %v1215, %v292
    %v1269 = vmul.f32 %v1219, %v293
    %v1270 = vmul.f32 %v1223, %v294
    %v1271 = vmul.f32 %v1227, %v295
    %v1272 = vmul.f32 %v1231, %v296
    %v1273 = vmul.f32 %v1235, %v297
    %v1274 = vmul.f32 %v1239, %v298
    %v1275 = vmul.f32 %v1243, %v299
    %v1276 = vmul.f32 %v1247, %v300
    %v1277 = vmul.f32 %v1251, %v301
    %v1278 = vmul.f32 %v1255, %v302
    %v1279 = vmul.f32 %v1259, %v303
    %v1280 = vmul.f32 %v1263, %v304
    %1297 = vrot.lane.b32.xlu0 %v1265, 32
    %v1298 = vpop.permute.xlu0 %1297
    %1299 = vrot.lane.b32.xlu0 %v1266, 32
    %v1300 = vpop.permute.xlu0 %1299
    %1301 = vrot.lane.b32.xlu0 %v1267, 32
    %v1302 = vpop.permute.xlu0 %1301
    %1303 = vrot.lane.b32.xlu0 %v1268, 32
    %v1304 = vpop.permute.xlu0 %1303
    %1305 = vrot.lane.b32.xlu0 %v1269, 32
    %v1306 = vpop.permute.xlu0 %1305
    %1307 = vrot.lane.b32.xlu0 %v1270, 32
    %v1308 = vpop.permute.xlu0 %1307
    %1309 = vrot.lane.b32.xlu0 %v1271, 32
    %v1310 = vpop.permute.xlu0 %1309
    %1311 = vrot.lane.b32.xlu0 %v1272, 32
    %v1312 = vpop.permute.xlu0 %1311
    %1313 = vrot.lane.b32.xlu0 %v1273, 32
    %v1314 = vpop.permute.xlu0 %1313
    %1315 = vrot.lane.b32.xlu0 %v1274, 32
    %v1316 = vpop.permute.xlu0 %1315
    %1317 = vrot.lane.b32.xlu0 %v1275, 32
    %v1318 = vpop.permute.xlu0 %1317
    %1319 = vrot.lane.b32.xlu0 %v1276, 32
    %v1320 = vpop.permute.xlu0 %1319
    %1321 = vrot.lane.b32.xlu0 %v1277, 32
    %v1322 = vpop.permute.xlu0 %1321
    %1323 = vrot.lane.b32.xlu0 %v1278, 32
    %v1324 = vpop.permute.xlu0 %1323
    %1325 = vrot.lane.b32.xlu0 %v1279, 32
    %v1326 = vpop.permute.xlu0 %1325
    %1327 = vrot.lane.b32.xlu0 %v1280, 32
    %v1328 = vpop.permute.xlu0 %1327
    %v1345 = vadd.f32 %v1185, %v1298
    %v1346 = vadd.f32 %v1186, %v1300
    %v1347 = vadd.f32 %v1187, %v1302
    %v1348 = vadd.f32 %v1188, %v1304
    %v1349 = vadd.f32 %v1189, %v1306
    %v1350 = vadd.f32 %v1190, %v1308
    %v1351 = vadd.f32 %v1191, %v1310
    %v1352 = vadd.f32 %v1192, %v1312
    %v1353 = vadd.f32 %v1193, %v1314
    %v1354 = vadd.f32 %v1194, %v1316
    %v1355 = vadd.f32 %v1195, %v1318
    %v1356 = vadd.f32 %v1196, %v1320
    %v1357 = vadd.f32 %v1197, %v1322
    %v1358 = vadd.f32 %v1198, %v1324
    %v1359 = vadd.f32 %v1199, %v1326
    %v1360 = vadd.f32 %v1200, %v1328
    %1361 = vset.pattern.permute.xlu0 7
    %1362 = vperm.xlu0 %1361, %v227
    %v1363 = vpop.permute.xlu0 %1362
    %1365 = vset.pattern.permute.xlu0 7
    %1366 = vperm.xlu0 %1365, %v230
    %v1367 = vpop.permute.xlu0 %1366
    %1369 = vset.pattern.permute.xlu0 7
    %1370 = vperm.xlu0 %1369, %v235
    %v1371 = vpop.permute.xlu0 %1370
    %1373 = vset.pattern.permute.xlu0 7
    %1374 = vperm.xlu0 %1373, %v238
    %v1375 = vpop.permute.xlu0 %1374
    %1377 = vset.pattern.permute.xlu0 7
    %1378 = vperm.xlu0 %1377, %v243
    %v1379 = vpop.permute.xlu0 %1378
    %1381 = vset.pattern.permute.xlu0 7
    %1382 = vperm.xlu0 %1381, %v246
    %v1383 = vpop.permute.xlu0 %1382
    %1385 = vset.pattern.permute.xlu0 7
    %1386 = vperm.xlu0 %1385, %v251
    %v1387 = vpop.permute.xlu0 %1386
    %1389 = vset.pattern.permute.xlu0 7
    %1390 = vperm.xlu0 %1389, %v254
    %v1391 = vpop.permute.xlu0 %1390
    %1393 = vset.pattern.permute.xlu0 7
    %1394 = vperm.xlu0 %1393, %v259
    %v1395 = vpop.permute.xlu0 %1394
    %1397 = vset.pattern.permute.xlu0 7
    %1398 = vperm.xlu0 %1397, %v262
    %v1399 = vpop.permute.xlu0 %1398
    %1401 = vset.pattern.permute.xlu0 7
    %1402 = vperm.xlu0 %1401, %v267
    %v1403 = vpop.permute.xlu0 %1402
    %1405 = vset.pattern.permute.xlu0 7
    %1406 = vperm.xlu0 %1405, %v270
    %v1407 = vpop.permute.xlu0 %1406
    %1409 = vset.pattern.permute.xlu0 7
    %1410 = vperm.xlu0 %1409, %v275
    %v1411 = vpop.permute.xlu0 %1410
    %1413 = vset.pattern.permute.xlu0 7
    %1414 = vperm.xlu0 %1413, %v278
    %v1415 = vpop.permute.xlu0 %1414
    %1417 = vset.pattern.permute.xlu0 7
    %1418 = vperm.xlu0 %1417, %v283
    %v1419 = vpop.permute.xlu0 %1418
    %1421 = vset.pattern.permute.xlu0 7
    %1422 = vperm.xlu0 %1421, %v286
    %v1423 = vpop.permute.xlu0 %1422
    %v1425 = vmul.f32 %v1363, %v289
    %v1426 = vmul.f32 %v1367, %v290
    %v1427 = vmul.f32 %v1371, %v291
    %v1428 = vmul.f32 %v1375, %v292
    %v1429 = vmul.f32 %v1379, %v293
    %v1430 = vmul.f32 %v1383, %v294
    %v1431 = vmul.f32 %v1387, %v295
    %v1432 = vmul.f32 %v1391, %v296
    %v1433 = vmul.f32 %v1395, %v297
    %v1434 = vmul.f32 %v1399, %v298
    %v1435 = vmul.f32 %v1403, %v299
    %v1436 = vmul.f32 %v1407, %v300
    %v1437 = vmul.f32 %v1411, %v301
    %v1438 = vmul.f32 %v1415, %v302
    %v1439 = vmul.f32 %v1419, %v303
    %v1440 = vmul.f32 %v1423, %v304
    %1457 = vrot.lane.b32.xlu0 %v1425, 16
    %v1458 = vpop.permute.xlu0 %1457
    %1459 = vrot.lane.b32.xlu0 %v1426, 16
    %v1460 = vpop.permute.xlu0 %1459
    %1461 = vrot.lane.b32.xlu0 %v1427, 16
    %v1462 = vpop.permute.xlu0 %1461
    %1463 = vrot.lane.b32.xlu0 %v1428, 16
    %v1464 = vpop.permute.xlu0 %1463
    %1465 = vrot.lane.b32.xlu0 %v1429, 16
    %v1466 = vpop.permute.xlu0 %1465
    %1467 = vrot.lane.b32.xlu0 %v1430, 16
    %v1468 = vpop.permute.xlu0 %1467
    %1469 = vrot.lane.b32.xlu0 %v1431, 16
    %v1470 = vpop.permute.xlu0 %1469
    %1471 = vrot.lane.b32.xlu0 %v1432, 16
    %v1472 = vpop.permute.xlu0 %1471
    %1473 = vrot.lane.b32.xlu0 %v1433, 16
    %v1474 = vpop.permute.xlu0 %1473
    %1475 = vrot.lane.b32.xlu0 %v1434, 16
    %v1476 = vpop.permute.xlu0 %1475
    %1477 = vrot.lane.b32.xlu0 %v1435, 16
    %v1478 = vpop.permute.xlu0 %1477
    %1479 = vrot.lane.b32.xlu0 %v1436, 16
    %v1480 = vpop.permute.xlu0 %1479
    %1481 = vrot.lane.b32.xlu0 %v1437, 16
    %v1482 = vpop.permute.xlu0 %1481
    %1483 = vrot.lane.b32.xlu0 %v1438, 16
    %v1484 = vpop.permute.xlu0 %1483
    %1485 = vrot.lane.b32.xlu0 %v1439, 16
    %v1486 = vpop.permute.xlu0 %1485
    %1487 = vrot.lane.b32.xlu0 %v1440, 16
    %v1488 = vpop.permute.xlu0 %1487
    %v1505 = vadd.f32 %v1345, %v1458
    %v1506 = vadd.f32 %v1346, %v1460
    %v1507 = vadd.f32 %v1347, %v1462
    %v1508 = vadd.f32 %v1348, %v1464
    %v1509 = vadd.f32 %v1349, %v1466
    %v1510 = vadd.f32 %v1350, %v1468
    %v1511 = vadd.f32 %v1351, %v1470
    %v1512 = vadd.f32 %v1352, %v1472
    %v1513 = vadd.f32 %v1353, %v1474
    %v1514 = vadd.f32 %v1354, %v1476
    %v1515 = vadd.f32 %v1355, %v1478
    %v1516 = vadd.f32 %v1356, %v1480
    %v1517 = vadd.f32 %v1357, %v1482
    %v1518 = vadd.f32 %v1358, %v1484
    %v1519 = vadd.f32 %v1359, %v1486
    %v1520 = vadd.f32 %v1360, %v1488
    %1521 = vxpose.xlu0.b32.start [1/16] %v1505, 128
    %1522 = vxpose.xlu0.b32.cont [2/16] %v1506, 128
    %1523 = vxpose.xlu0.b32.cont [3/16] %v1507, 128
    %1524 = vxpose.xlu0.b32.cont [4/16] %v1508, 128
    %1525 = vxpose.xlu0.b32.cont [5/16] %v1509, 128
    %1526 = vxpose.xlu0.b32.cont [6/16] %v1510, 128
    %1527 = vxpose.xlu0.b32.cont [7/16] %v1511, 128
    %1528 = vxpose.xlu0.b32.cont [8/16] %v1512, 128
    %1529 = vxpose.xlu0.b32.cont [9/16] %v1513, 128
    %1530 = vxpose.xlu0.b32.cont [10/16] %v1514, 128
    %1531 = vxpose.xlu0.b32.cont [11/16] %v1515, 128
    %1532 = vxpose.xlu0.b32.cont [12/16] %v1516, 128
    %1533 = vxpose.xlu0.b32.cont [13/16] %v1517, 128
    %1534 = vxpose.xlu0.b32.cont [14/16] %v1518, 128
    %1535 = vxpose.xlu0.b32.cont [15/16] %v1519, 128
    %1536 = vxpose.xlu0.b32.end [16/16] %v1520, 128
    %v1537 = vpop.trf.xlu0
    %v1538 = vpop.trf.xlu0
    %v1539 = vpop.trf.xlu0
    %v1540 = vpop.trf.xlu0
    %v1541 = vpop.trf.xlu0
    %v1542 = vpop.trf.xlu0
    %v1543 = vpop.trf.xlu0
    %v1544 = vpop.trf.xlu0
    %v1545 = vpop.trf.xlu0
    %v1546 = vpop.trf.xlu0
    %v1547 = vpop.trf.xlu0
    %v1548 = vpop.trf.xlu0
    %v1549 = vpop.trf.xlu0
    %v1550 = vpop.trf.xlu0
    %v1551 = vpop.trf.xlu0
    %v1552 = vpop.trf.xlu0
    %v1553 = vpack.c.bf16 %v1538, %v1537
    %v1554 = vld [vmem:[#allocation2] sm:$0xff]
    %v1555 = vld [vmem:[#allocation2 + $0x8] sm:$0xff]
    %1556 = vmatprep.subr.bf16.mxu0 0
    %1557 = vmatpush1.bf16.msra.mxu0 %v135
    %1558 = vmatprep.subr.bf16.mxu0 0
    %1559 = vmatpush1.bf16.msra.mxu0 %v134
    %1560 = vmatprep.subr.bf16.mxu0 0
    %1561 = vmatpush1.bf16.msra.mxu0 %v133
    %1562 = vmatprep.subr.bf16.mxu0 0
    %1563 = vmatpush1.bf16.msra.mxu0 %v132
    %1564 = vmatprep.subr.bf16.mxu0 0
    %1565 = vmatpush1.bf16.msra.mxu0 %v131
    %1566 = vmatprep.subr.bf16.mxu0 0
    %1567 = vmatpush1.bf16.msra.mxu0 %v130
    %1568 = vmatprep.subr.bf16.mxu0 0
    %1569 = vmatpush1.bf16.msra.mxu0 %v129
    %1570 = vmatprep.subr.bf16.mxu0 0
    %1571 = vmatpush1.bf16.msra.mxu0 %v128
    %1572 = vmatprep.subr.bf16.mxu0 0
    %1573 = vmatpush2.bf16.msra.mxu0 0
    %1574 = vmatprep.subr.bf16.mxu0 0
    %1575 = vmatpush2.bf16.msra.mxu0 0
    %1576 = vmatprep.subr.bf16.mxu0 0
    %1577 = vmatpush2.bf16.msra.mxu0 0
    %1578 = vmatprep.subr.bf16.mxu0 0
    %1579 = vmatpush2.bf16.msra.mxu0 0
    %1580 = vmatprep.subr.bf16.mxu0 0
    %1581 = vmatpush2.bf16.msra.mxu0 0
    %1582 = vmatprep.subr.bf16.mxu0 0
    %1583 = vmatpush2.bf16.msra.mxu0 0
    %1584 = vmatprep.subr.bf16.mxu0 0
    %1585 = vmatpush2.bf16.msra.mxu0 0
    %1586 = vmatprep.subr.bf16.mxu0 0
    %1587 = vmatpush2.bf16.msra.mxu0 0
    %1588 = vmatprep.mubr.bf16.mxu0 0
    %1589 = vmatmul.mubr.bf16.gmra.mxu0 %v1553
    %v1590 = vpop.f32.mrf.mxu0
    %v1591 = vadd.f32 0.0, %v1590
    %v1592 = vpop.f32.mrf.mxu0
    %v1593 = vpop.f32.mrf.mxu0
    %v1594 = vadd.f32 0.0, %v1593
    %v1595 = vpop.f32.mrf.mxu0
    %1596 = vdwg.mxu0
    %v1597 = vadd.f32 %v1554, %v1591
    %v1598 = vadd.f32 %v1555, %v1594
    %1599 = vst [vmem:[#allocation2] sm:$0xff] %v1597
    %1600 = vst [vmem:[#allocation2 + $0x8] sm:$0xff] %v1598
    // Predicated region
    $region22: #{tpu_custom_call.1} parent=1 // pred_check
      %p1601 = pneg %p58
    $region23: #{tpu_custom_call.1} parent=1 // pred_check_branch
      %1603 = sbr.rel (%p1601) target = $region25
    $region24: #{tpu_custom_call.1} parent=1 // pred_region
      %v1604 = vld [vmem:[#allocation2] sm:$0xff]
      %v1605 = vld [vmem:[#allocation2 + $0x8] sm:$0xff]
      %1606 = vst [vmem:[#allocation6] sm:$0xff] %v1604
      %1607 = vst [vmem:[#allocation6 + $0x8] sm:$0xff] %v1605
    $region25: #{tpu_custom_call.1} parent=1 // pred_fallthru
      _
    // Predicated region
    $region26: #{tpu_custom_call.1} parent=1 // pred_check
      _
    $region27: #{tpu_custom_call.1} parent=1 // pred_check_branch
      %1609 = sbr.rel (0) target = $region29
    $region28: #{tpu_custom_call.1} parent=1 // pred_region
      %s1611 = ssub.s32 256, 256
      %1612 = vsyncadd [#allocation5], %s1611
      %s1613 = sshll.u32 [#allocation6], 4
      %s1614 = int_to_ptr.vmem [resolvable:$true] %s1613
      %1619 = dma.vmem_to_hbm [thread:$0]  %s1614, 256, %s3, [#allocation5], 128, 128, 8
    $region29: #{tpu_custom_call.1} parent=1 // pred_fallthru
      _
    // Predicated region
    $region30: #{tpu_custom_call.1} parent=1 // pred_check
      _
    $region31: #{tpu_custom_call.1} parent=1 // pred_check_branch
      %1621 = sbr.rel (0) target = $region33
    $region32: #{tpu_custom_call.1} parent=1 // pred_region
      %1622 = dma.done [#allocation5], 256
    $region33: #{tpu_custom_call.1} parent=1 // pred_fallthru
      _
    %1623 = vsyncpa [#allocation4], 1
    %1624 = vsyncpa [#allocation5], 1

</llo_original>
